<compile_context>
chip_gen: v6e
topology: v6e:2x2x1
jax: 0.10.0
libtpu: 0.0.40
codegen_flags: <defaults>
</compile_context>

<pallas_src>
import jax
import jax.numpy as jnp
from jax.experimental import pallas as pl
from jax.experimental.pallas import tpu as pltpu


# ---------------------------------------------------------------- kernel ----
def _fc_kernel(x_ref, w1_ref, b1_ref, w2_ref, b2_ref, o_ref, acc_ref):
    k = pl.program_id(1)

    # Zero the (TB, Hid) accumulator at the start of each batch block's K loop.
    @pl.when(k == 0)
    def _():
        acc_ref[...] = jnp.zeros_like(acc_ref)

    # Partial first linear: (TB, TK) @ (TK, Hid) -> f32 accumulate on the MXU.
    acc_ref[...] += jnp.dot(
        x_ref[...], w1_ref[...], preferred_element_type=jnp.float32
    )

    # Epilogue on the last K step: bias + LeakyReLU + second linear, fused.
    @pl.when(k == pl.num_programs(1) - 1)
    def _():
        h = acc_ref[...] + b1_ref[...]
        # Dropout(0.5): eval-mode semantics => identity.
        # TODO(synk): training-mode dropout would need pltpu.prng_seed /
        #             pltpu.prng_random_bits masking + 1/(1-p) rescale.
        h = jnp.where(h > 0, h, 0.1 * h)          # LeakyReLU(0.1)
        y = jnp.dot(
            h.astype(w2_ref.dtype), w2_ref[...],
            preferred_element_type=jnp.float32,
        )
        o_ref[...] = (y + b2_ref[...]).astype(o_ref.dtype)


# ---------------------------------------------------------------- wrapper ---
def _round_up(x, m):
    return (x + m - 1) // m * m


def _pad2d(a, shape):
    # No-op (no HBM copy) when the operand is already aligned — important for
    # the real-size W1/W2 which are already 128-multiples.
    if tuple(a.shape) == tuple(shape):
        return a
    return jnp.pad(a, [(0, t - s) for s, t in zip(a.shape, shape)])


def _pick_tile_k(din_p, hid_p, weight_itemsize):
    # Largest 128-multiple K tile that divides padded Din and keeps ONE W1
    # tile <= ~20 MiB (x2 double buffers <= ~40 MiB scoped VMEM; conservative
    # enough for v7x's 64 MiB VMEM, generous for v5e/v6e's 128 MiB).
    budget_bytes = 20 * 1024 * 1024
    for tk in (4096, 2048, 1024, 512, 256, 128):
        if din_p % tk == 0 and tk * hid_p * weight_itemsize <= budget_bytes:
            return tk
    return 128


def fc_layer(x_nchw, w1, b1, w2, b2, *, weight_dtype=None):
    """Pallas implementation of FCLayer.forward (eval mode).

    x_nchw : (B, C, H, W)
    w1     : (Din, Hid)    (Din = C*H*W), stored input-major so y = x @ W + b
    b1     : (Hid,)
    w2     : (Hid, Dout)
    b2     : (Dout,)
    weight_dtype : optionally cast weights/activations (e.g. jnp.bfloat16) to
                   halve W1 HBM traffic; accumulation stays f32.
    returns (B, Dout) float32
    """
    B = x_nchw.shape[0]
    x = x_nchw.reshape(B, -1)                      # nn.Flatten (row-major C,H,W)
    din, hid = w1.shape
    dout = w2.shape[1]

    if weight_dtype is not None:
        w1 = w1.astype(weight_dtype)
        w2 = w2.astype(weight_dtype)
        x = x.astype(weight_dtype)
    x = x if weight_dtype is not None else x.astype(jnp.float32)
    b1 = b1.astype(jnp.float32)
    b2 = b2.astype(jnp.float32)

    # ---- tiling ------------------------------------------------------------
    hid_p = _round_up(hid, 128)
    dout_p = _round_up(dout, 128)
    din_p = _round_up(din, 128)
    tk = _pick_tile_k(din_p, hid_p, jnp.dtype(w1.dtype).itemsize)

    tb = 256                                        # max batch tile (MXU rows)
    b_p = _round_up(B, 8)
    if b_p <= tb:
        tb = b_p
    else:
        b_p = _round_up(B, tb)
    nb = b_p // tb
    nk = din_p // tk

    # ---- padding (zero padding is semantically inert, see notes) -----------
    xp = _pad2d(x, (b_p, din_p))
    w1p = _pad2d(w1, (din_p, hid_p))
    b1p = _pad2d(b1.reshape(1, hid), (1, hid_p))
    w2p = _pad2d(w2, (hid_p, dout_p))
    b2p = _pad2d(b2.reshape(1, dout), (1, dout_p))

    cost = pl.CostEstimate(
        flops=2 * B * (din * hid + hid * dout),
        transcendentals=0,
        bytes_accessed=(
            xp.size * xp.dtype.itemsize
            + w1p.size * w1p.dtype.itemsize
            + w2p.size * w2p.dtype.itemsize
            + b1p.size * 4 + b2p.size * 4
            + b_p * dout_p * 4
        ),
    )

    out = pl.pallas_call(
        _fc_kernel,
        out_shape=jax.ShapeDtypeStruct((b_p, dout_p), jnp.float32),
        grid_spec=pltpu.PrefetchScalarGridSpec(
            num_scalar_prefetch=0,
            grid=(nb, nk),                          # (batch, K-reduction)
            in_specs=[
                pl.BlockSpec((tb, tk), lambda b, k: (b, k)),       # x tile
                pl.BlockSpec((tk, hid_p), lambda b, k: (k, 0)),    # W1 stream
                pl.BlockSpec((1, hid_p), lambda b, k: (0, 0)),     # b1 resident
                pl.BlockSpec((hid_p, dout_p), lambda b, k: (0, 0)),  # W2 resident
                pl.BlockSpec((1, dout_p), lambda b, k: (0, 0)),    # b2 resident
            ],
            out_specs=pl.BlockSpec((tb, dout_p), lambda b, k: (b, 0)),
            scratch_shapes=[pltpu.VMEM((tb, hid_p), jnp.float32)],  # accumulator
        ),
        compiler_params=pltpu.CompilerParams(
            dimension_semantics=("parallel", "arbitrary"),
            vmem_limit_bytes=48 << 20,
        ),
        cost_estimate=cost,
    )(xp, w1p, b1p, w2p, b2p)

    return out[:B, :dout]


# ---------------------------------------------------------------- main ------
if __name__ == "__main__":
    # Small shapes consistent with the module structure:
    #   B=2, C=16, H=W=7  -> Din = 16*7*7 = 784 (padded to 896, TK=128, 7 K-steps)
    #   hidden = 256, Dout = 7*7*13 = 637 (padded to 640)
    B, C, H, W = 2, 16, 7, 7
    DIN, HID, DOUT = C * H * W, 256, 7 * 7 * 13

    key = jax.random.PRNGKey(0)
    kx, kw1, kb1, kw2, kb2 = jax.random.split(key, 5)

    x = jax.random.normal(kx, (B, C, H, W), dtype=jnp.float32)

    # PyTorch nn.Linear-style init: U(-1/sqrt(fan_in), 1/sqrt(fan_in)).
    lim1 = 1.0 / jnp.sqrt(jnp.float32(DIN))
    w1 = jax.random.uniform(kw1, (DIN, HID), jnp.float32, -lim1, lim1)
    b1 = jax.random.uniform(kb1, (HID,), jnp.float32, -lim1, lim1)
    lim2 = 1.0 / jnp.sqrt(jnp.float32(HID))
    w2 = jax.random.uniform(kw2, (HID, DOUT), jnp.float32, -lim2, lim2)
    b2 = jax.random.uniform(kb2, (DOUT,), jnp.float32, -lim2, lim2)

    out = fc_layer(x, w1, b1, w2, b2)               # f32 weights: exact semantics
    out = jax.block_until_ready(out)

    # Pure-JAX reference (eval-mode FCLayer).
    xf = x.reshape(B, -1)
    h_ref = xf @ w1 + b1
    h_ref = jnp.where(h_ref > 0, h_ref, 0.1 * h_ref)
    ref = h_ref @ w2 + b2

    assert out.shape == (B, DOUT), out.shape
    assert jnp.allclose(out, ref, atol=1e-4, rtol=1e-4), float(
        jnp.max(jnp.abs(out - ref))
    )
    print("KERNEL_OK")
</pallas_src>

<mosaic_0001>
module attributes {stable_mosaic.version = 11 : i64} {
  func.func @_fc_kernel(%arg0: i32, %arg1: i32, %arg2: memref<8x128xf32, #tpu.memory_space<vmem>>, %arg3: memref<128x256xf32, #tpu.memory_space<vmem>>, %arg4: memref<1x256xf32, #tpu.memory_space<vmem>>, %arg5: memref<256x640xf32, #tpu.memory_space<vmem>>, %arg6: memref<1x640xf32, #tpu.memory_space<vmem>>, %arg7: memref<8x640xf32, #tpu.memory_space<vmem>>, %arg8: memref<8x256xf32, #tpu.memory_space<vmem>>) attributes {dimension_semantics = [#tpu.dimension_semantics<parallel>, #tpu.dimension_semantics<arbitrary>], iteration_bounds = array<i64: 1, 7>, scalar_prefetch = 0 : i64, scratch_operands = 1 : i64, tpu.core_type = #tpu.core_type<tc>, window_params = [{transform_indices = @transform_0, window_bounds = array<i64: 8, 128>}, {transform_indices = @transform_1, window_bounds = array<i64: 128, 256>}, {pipeline_mode = #tpu.pipeline_mode<synchronous>, transform_indices = @transform_2, window_bounds = array<i64: 1, 256>}, {pipeline_mode = #tpu.pipeline_mode<synchronous>, transform_indices = @transform_3, window_bounds = array<i64: 256, 640>}, {pipeline_mode = #tpu.pipeline_mode<synchronous>, transform_indices = @transform_4, window_bounds = array<i64: 1, 640>}, {transform_indices = @transform_5, window_bounds = array<i64: 8, 640>}]} {
    %c0_i32 = arith.constant 0 : i32
    %0 = arith.cmpi eq, %arg1, %c0_i32 : i32
    %1 = arith.extui %0 : i1 to i32
    %c0_i32_0 = arith.constant 0 : i32
    %2 = arith.cmpi ne, %1, %c0_i32_0 : i32
    scf.if %2 {
      %cst_9 = arith.constant 0.000000e+00 : f32
      %12 = vector.broadcast %cst_9 : f32 to vector<8x256xf32>
      %c0_10 = arith.constant 0 : index
      %c0_11 = arith.constant 0 : index
      %13 = vector.load %arg8[%c0_10, %c0_11] : memref<8x256xf32, #tpu.memory_space<vmem>>, vector<8x256xf32>
      tpu.vector_store %arg8[%c0_10, %c0_11], %12 {strides = array<i32>} : memref<8x256xf32, #tpu.memory_space<vmem>>, vector<8x256xf32>,
    } else {
    }
    %c0 = arith.constant 0 : index
    %c0_1 = arith.constant 0 : index
    %3 = vector.load %arg8[%c0, %c0_1] : memref<8x256xf32, #tpu.memory_space<vmem>>, vector<8x256xf32>
    %c0_2 = arith.constant 0 : index
    %c0_3 = arith.constant 0 : index
    %4 = vector.load %arg2[%c0_2, %c0_3] : memref<8x128xf32, #tpu.memory_space<vmem>>, vector<8x128xf32>
    %c0_4 = arith.constant 0 : index
    %c0_5 = arith.constant 0 : index
    %5 = vector.load %arg3[%c0_4, %c0_5] : memref<128x256xf32, #tpu.memory_space<vmem>>, vector<128x256xf32>
    %cst = arith.constant dense<0.000000e+00> : vector<8x256xf32>
    %6 = tpu.matmul %4, %5, %cst {dimension_numbers = #tpu.dot_dimension_numbers<[1], [0], [0], [1], [0, 0, 1, 1], [], []>} : vector<8x128xf32>, vector<128x256xf32>, vector<8x256xf32> -> vector<8x256xf32>
    %7 = arith.addf %3, %6 : vector<8x256xf32>
    %c0_6 = arith.constant 0 : index
    %c0_7 = arith.constant 0 : index
    %8 = vector.load %arg8[%c0_6, %c0_7] : memref<8x256xf32, #tpu.memory_space<vmem>>, vector<8x256xf32>
    tpu.vector_store %arg8[%c0_6, %c0_7], %7 {strides = array<i32>} : memref<8x256xf32, #tpu.memory_space<vmem>>, vector<8x256xf32>,
    %c6_i32 = arith.constant 6 : i32
    %9 = arith.cmpi eq, %arg1, %c6_i32 : i32
    %10 = arith.extui %9 : i1 to i32
    %c0_i32_8 = arith.constant 0 : i32
    %11 = arith.cmpi ne, %10, %c0_i32_8 : i32
    scf.if %11 {
      %c0_9 = arith.constant 0 : index
      %c0_10 = arith.constant 0 : index
      %12 = vector.load %arg8[%c0_9, %c0_10] : memref<8x256xf32, #tpu.memory_space<vmem>>, vector<8x256xf32>
      %c0_11 = arith.constant 0 : index
      %c0_12 = arith.constant 0 : index
      %13 = vector.load %arg4[%c0_11, %c0_12] : memref<1x256xf32, #tpu.memory_space<vmem>>, vector<1x256xf32>
      %14 = vector.broadcast %13 : vector<1x256xf32> to vector<8x256xf32>
      %15 = arith.addf %12, %14 : vector<8x256xf32>
      %cst_13 = arith.constant 0.000000e+00 : f32
      %16 = vector.broadcast %cst_13 : f32 to vector<8x256xf32>
      %17 = arith.cmpf ogt, %15, %16 : vector<8x256xf32>
      %cst_14 = arith.constant 1.000000e-01 : f32
      %18 = vector.broadcast %cst_14 : f32 to vector<8x256xf32>
      %19 = arith.mulf %18, %15 : vector<8x256xf32>
      %20 = arith.select %17, %15, %19 : vector<8x256xi1>, vector<8x256xf32>
      %c0_15 = arith.constant 0 : index
      %c0_16 = arith.constant 0 : index
      %21 = vector.load %arg5[%c0_15, %c0_16] : memref<256x640xf32, #tpu.memory_space<vmem>>, vector<256x640xf32>
      %cst_17 = arith.constant dense<0.000000e+00> : vector<8x640xf32>
      %22 = tpu.matmul %20, %21, %cst_17 {dimension_numbers = #tpu.dot_dimension_numbers<[1], [0], [0], [1], [0, 0, 1, 1], [], []>} : vector<8x256xf32>, vector<256x640xf32>, vector<8x640xf32> -> vector<8x640xf32>
      %c0_18 = arith.constant 0 : index
      %c0_19 = arith.constant 0 : index
      %23 = vector.load %arg6[%c0_18, %c0_19] : memref<1x640xf32, #tpu.memory_space<vmem>>, vector<1x640xf32>
      %24 = vector.broadcast %23 : vector<1x640xf32> to vector<8x640xf32>
      %25 = arith.addf %22, %24 : vector<8x640xf32>
      %c0_20 = arith.constant 0 : index
      %c0_21 = arith.constant 0 : index
      %26 = vector.load %arg7[%c0_20, %c0_21] : memref<8x640xf32, #tpu.memory_space<vmem>>, vector<8x640xf32>
      tpu.vector_store %arg7[%c0_20, %c0_21], %25 {strides = array<i32>} : memref<8x640xf32, #tpu.memory_space<vmem>>, vector<8x640xf32>,
    } else {
    }
    return
  }
  func.func @transform_0(%arg0: i32, %arg1: i32) -> (i32, i32) {
    %c0_i32 = arith.constant 0 : i32
    return %arg0, %arg1 : i32, i32
  }
  func.func @transform_1(%arg0: i32, %arg1: i32) -> (i32, i32) {
    %c0_i32 = arith.constant 0 : i32
    %c0_i32_0 = arith.constant 0 : i32
    return %arg1, %c0_i32 : i32, i32
  }
  func.func @transform_2(%arg0: i32, %arg1: i32) -> (i32, i32) {
    %c0_i32 = arith.constant 0 : i32
    %c0_i32_0 = arith.constant 0 : i32
    %c0_i32_1 = arith.constant 0 : i32
    return %c0_i32, %c0_i32_0 : i32, i32
  }
  func.func @transform_3(%arg0: i32, %arg1: i32) -> (i32, i32) {
    %c0_i32 = arith.constant 0 : i32
    %c0_i32_0 = arith.constant 0 : i32
    %c0_i32_1 = arith.constant 0 : i32
    return %c0_i32, %c0_i32_0 : i32, i32
  }
  func.func @transform_4(%arg0: i32, %arg1: i32) -> (i32, i32) {
    %c0_i32 = arith.constant 0 : i32
    %c0_i32_0 = arith.constant 0 : i32
    %c0_i32_1 = arith.constant 0 : i32
    return %c0_i32, %c0_i32_0 : i32, i32
  }
  func.func @transform_5(%arg0: i32, %arg1: i32) -> (i32, i32) {
    %c0_i32 = arith.constant 0 : i32
    %c0_i32_0 = arith.constant 0 : i32
    return %arg0, %c0_i32 : i32, i32
  }
}

</mosaic_0001>

<llo_original>
// kernel: tpu_custom_call.1
$region0: #{tpu_custom_call.1}
  #allocation0 [shape = 'u32[]', space=smem, size = 0x4, offset = 0x4, fixed_abs, tag = 'smem constant byte address 0x4 - core index']
  #allocation1 [shape = 'u32[144,128]{1,0:T(1,128)}', space=vmem, size = 0x12000, scoped, tag = 'internal scratch']
  #allocation2 [shape = 'f32[8,256]{1,0:T(8,128)}', space=vmem, size = 0x2000, scoped, tag = 'scratch operand']
  %s0 = inlined_call_operand.hbm [shape: f32[8,896], index: 0, kind: input, shape index: {}]
  %s1 = inlined_call_operand.hbm [shape: f32[896,256], index: 1, kind: input, shape index: {}]
  %s2 = inlined_call_operand.vmem [shape: f32[1,256], index: 2, kind: input, shape index: {}]
  %s3 = inlined_call_operand.hbm [shape: f32[256,640], index: 3, kind: input, shape index: {}]
  %s4 = inlined_call_operand.vmem [shape: f32[1,640], index: 4, kind: input, shape index: {}]
  %s5 = inlined_call_operand.hbm [shape: f32[8,640], index: 5, kind: output, shape index: {}]
  %s6 = sld [smem:[#allocation0]]
  $region73: #{tpu_custom_call.1} parent=0
    _
  %s8 = ssub.s32 1, %s6
  %s9 = scalar_select 0, %s8, %s6
  $region1: #{tpu_custom_call.1} parent=0
    #allocation3 [shape = 'u8[8192]{0}', space=vmem, size = 0x2000, scoped, tag = 'input window, operand 0']
    #allocation4 [shape = 's32[2]{0}', space=sflag, size = 0x8, scoped, tag = 'scoped memory for tpu_custom_call.1']
    #allocation5 [shape = 's32[2]{0}', space=sflag, size = 0x8, scoped, tag = 'scoped memory for tpu_custom_call.1']
    #allocation6 [shape = 'u8[262144]{0}', space=vmem, size = 0x40000, scoped, tag = 'input window, operand 1']
    #allocation7 [shape = 's32[2]{0}', space=sflag, size = 0x8, scoped, tag = 'scoped memory for tpu_custom_call.1']
    #allocation8 [shape = 'u8[655360]{0}', space=vmem, size = 0xa0000, scoped, tag = 'input window, operand 3, single buffered']
    #allocation9 [shape = 'u8[20480]{0}', space=vmem, size = 0x5000, scoped, tag = 'output window, operand 0, single buffered']
    %10 = vsyncpa [#allocation4], 0
    %s11 = scalar_lea.sflag [#allocation4], 1
    %12 = vsyncpa %s11, 0
    %13 = vsyncpa [#allocation7], 0
    %s14 = scalar_lea.sflag [#allocation7], 1
    %15 = vsyncpa %s14, 0
    %16 = vsyncpa [#allocation5], 0
    loop: start=0, step=1, limit=9
    $region2: #{tpu_custom_call.1} parent=1 // loop_pre_header
      _
    $region3: #{tpu_custom_call.1} parent=1 // loop_header
      %s18 = sphi 0, %s22
      %p19 = scmp.ge.s32.totalorder %s18, 9
      %s25 = sphi 0, %s37
      %s26 = sphi 0, %s33
      %s27 = sphi 0, %s25
      %s28 = sphi 0, %s26
      %s29 = sphi 0, %s27
      %s30 = sphi 0, %s28
      %s42 = sphi 0, %s44
      %s45 = sphi 0, %s42
      %s46 = sphi 0, %s45
      %s62 = sphi 0, %s46
      %s68 = sphi 0, %s70
      %s71 = sphi 0, %s68
      %s72 = sphi 0, %s71
      %s88 = sphi 0, %s72
      %s92 = sphi 0, %s92
      %s94 = sphi 0, %s92
      %s95 = sphi 0, %s94
      %s109 = sphi 0, %s95
      %s113 = sphi 0, %s113
      %s115 = sphi 0, %s113
      %s116 = sphi 0, %s115
      %s130 = sphi 0, %s116
      %s134 = sphi 0, %s134
      %s136 = sphi 0, %s134
      %s137 = sphi 0, %s136
      %s151 = sphi 0, %s137
      %s157 = sphi 0, %s159
      %s160 = sphi 0, %s157
      %s161 = sphi 0, %s160
      %s177 = sphi 0, %s161
    $region4: #{tpu_custom_call.1} parent=1 // loop_header_branch
      %21 = sbr.rel (%p19) target = $region8
    $region5: #{tpu_custom_call.1} parent=1 // loop_body
      %s23 = ssub.s32 %s18, 1
      %s24 = ssub.s32 %s18, 2
      %s31 = sadd.s32 1, %s26
      %p32 = scmp.ge.s32.totalorder %s31, 7
      %s33 = scalar_select %p32, 0, %s31
      %s34 = sadd.s32 1, %s25
      %s35 = scalar_select %p32, %s34, %s25
      %p36 = scmp.ge.s32.totalorder %s35, 1
      %s37 = scalar_select %p36, 0, %s35
      %s38 = ssub.s32 %s25, %s37
      %s39 = ssub.s32 %s26, %s33
      %s40 = sor.u32 %s38, %s39
      %p41 = scmp.eq.s32.totalorder %s40, 0
      %s43 = sadd.s32 %s42, 1
      %s44 = scalar_select %p41, %s42, %s43
      %p47 = pneg %p41
      %p48 = scmp.eq.s32.totalorder %s18, 6
      %p49 = por %p47, %p48
      %p50 = scmp.ne.s32.totalorder %s42, %s45
      %p51 = scmp.eq.s32.totalorder %s18, 0
      %p52 = por %p50, %p51
      %p53 = scmp.ne.s32.totalorder %s42, %s45
      %p54 = scmp.eq.s32.totalorder %s23, 6
      %p55 = por %p53, %p54
      %p56 = scmp.ne.s32.totalorder %s45, %s46
      %p57 = scmp.eq.s32.totalorder %s23, 0
      %p58 = por %p56, %p57
      %p59 = scmp.ne.s32.totalorder %s45, %s46
      %p60 = scmp.eq.s32.totalorder %s24, 6
      %p61 = por %p59, %p60
      %p63 = scmp.ne.s32.totalorder %s46, %s62
      %p64 = scmp.eq.s32.totalorder %s24, 0
      %p65 = por %p63, %p64
      %s66 = ssub.s32 %s26, %s33
      %p67 = scmp.eq.s32.totalorder %s66, 0
      %s69 = sadd.s32 %s68, 1
      %s70 = scalar_select %p67, %s68, %s69
      %p73 = pneg %p67
      %p74 = scmp.eq.s32.totalorder %s18, 6
      %p75 = por %p73, %p74
      %p76 = scmp.ne.s32.totalorder %s68, %s71
      %p77 = scmp.eq.s32.totalorder %s18, 0
      %p78 = por %p76, %p77
      %p79 = scmp.ne.s32.totalorder %s68, %s71
      %p80 = scmp.eq.s32.totalorder %s23, 6
      %p81 = por %p79, %p80
      %p82 = scmp.ne.s32.totalorder %s71, %s72
      %p83 = scmp.eq.s32.totalorder %s23, 0
      %p84 = por %p82, %p83
      %p85 = scmp.ne.s32.totalorder %s71, %s72
      %p86 = scmp.eq.s32.totalorder %s24, 6
      %p87 = por %p85, %p86
      %p89 = scmp.ne.s32.totalorder %s72, %s88
      %p90 = scmp.eq.s32.totalorder %s24, 0
      %p91 = por %p89, %p90
      %s93 = sadd.s32 %s92, 1
      %p96 = scmp.eq.s32.totalorder %s18, 6
      %p97 = scmp.ne.s32.totalorder %s92, %s94
      %p98 = scmp.eq.s32.totalorder %s18, 0
      %p99 = por %p97, %p98
      %p100 = scmp.ne.s32.totalorder %s92, %s94
      %p101 = scmp.eq.s32.totalorder %s23, 6
      %p102 = por %p100, %p101
      %p103 = scmp.ne.s32.totalorder %s94, %s95
      %p104 = scmp.eq.s32.totalorder %s23, 0
      %p105 = por %p103, %p104
      %p106 = scmp.ne.s32.totalorder %s94, %s95
      %p107 = scmp.eq.s32.totalorder %s24, 6
      %p108 = por %p106, %p107
      %p110 = scmp.ne.s32.totalorder %s95, %s109
      %p111 = scmp.eq.s32.totalorder %s24, 0
      %p112 = por %p110, %p111
      %s114 = sadd.s32 %s113, 1
      %p117 = scmp.eq.s32.totalorder %s18, 6
      %p118 = scmp.ne.s32.totalorder %s113, %s115
      %p119 = scmp.eq.s32.totalorder %s18, 0
      %p120 = por %p118, %p119
      %p121 = scmp.ne.s32.totalorder %s113, %s115
      %p122 = scmp.eq.s32.totalorder %s23, 6
      %p123 = por %p121, %p122
      %p124 = scmp.ne.s32.totalorder %s115, %s116
      %p125 = scmp.eq.s32.totalorder %s23, 0
      %p126 = por %p124, %p125
      %p127 = scmp.ne.s32.totalorder %s115, %s116
      %p128 = scmp.eq.s32.totalorder %s24, 6
      %p129 = por %p127, %p128
      %p131 = scmp.ne.s32.totalorder %s116, %s130
      %p132 = scmp.eq.s32.totalorder %s24, 0
      %p133 = por %p131, %p132
      %s135 = sadd.s32 %s134, 1
      %p138 = scmp.eq.s32.totalorder %s18, 6
      %p139 = scmp.ne.s32.totalorder %s134, %s136
      %p140 = scmp.eq.s32.totalorder %s18, 0
      %p141 = por %p139, %p140
      %p142 = scmp.ne.s32.totalorder %s134, %s136
      %p143 = scmp.eq.s32.totalorder %s23, 6
      %p144 = por %p142, %p143
      %p145 = scmp.ne.s32.totalorder %s136, %s137
      %p146 = scmp.eq.s32.totalorder %s23, 0
      %p147 = por %p145, %p146
      %p148 = scmp.ne.s32.totalorder %s136, %s137
      %p149 = scmp.eq.s32.totalorder %s24, 6
      %p150 = por %p148, %p149
      %p152 = scmp.ne.s32.totalorder %s137, %s151
      %p153 = scmp.eq.s32.totalorder %s24, 0
      %p154 = por %p152, %p153
      %s155 = ssub.s32 %s25, %s37
      %p156 = scmp.eq.s32.totalorder %s155, 0
      %s158 = sadd.s32 %s157, 1
      %s159 = scalar_select %p156, %s157, %s158
      %p162 = pneg %p156
      %p163 = scmp.eq.s32.totalorder %s18, 6
      %p164 = por %p162, %p163
      %p165 = scmp.ne.s32.totalorder %s157, %s160
      %p166 = scmp.eq.s32.totalorder %s18, 0
      %p167 = por %p165, %p166
      %p168 = scmp.ne.s32.totalorder %s157, %s160
      %p169 = scmp.eq.s32.totalorder %s23, 6
      %p170 = por %p168, %p169
      %p171 = scmp.ne.s32.totalorder %s160, %s161
      %p172 = scmp.eq.s32.totalorder %s23, 0
      %p173 = por %p171, %p172
      %p174 = scmp.ne.s32.totalorder %s160, %s161
      %p175 = scmp.eq.s32.totalorder %s24, 6
      %p176 = por %p174, %p175
      %p178 = scmp.ne.s32.totalorder %s161, %s177
      %p179 = scmp.eq.s32.totalorder %s24, 0
      %p180 = por %p178, %p179
      %p181 = scmp.le.s32.totalorder 1, %s18
      %p182 = scmp.lt.s32.totalorder %s18, 8
      %p183 = pnand %p181, %p182
      %p184 = pneg %p183
      // Predicated region
      $region9: #{tpu_custom_call.1} parent=5 // pred_check
        _
      $region10: #{tpu_custom_call.1} parent=5 // pred_check_branch
        %186 = sbr.rel (%p183) target = $region12
      $region11: #{tpu_custom_call.1} parent=5 // pred_region
        %s187 = ssub.s32 %s18, 1
        // Predicated region
        $region13: #{tpu_custom_call.1} parent=11 // pred_check
          %p188 = pneg %p105
        $region14: #{tpu_custom_call.1} parent=11 // pred_check_branch
          %190 = sbr.rel (%p188) target = $region16
        $region15: #{tpu_custom_call.1} parent=11 // pred_region
          _
        $region16: #{tpu_custom_call.1} parent=11 // pred_fallthru
          _
        // Predicated region
        $region17: #{tpu_custom_call.1} parent=11 // pred_check
          %p191 = pneg %p126
        $region18: #{tpu_custom_call.1} parent=11 // pred_check_branch
          %193 = sbr.rel (%p191) target = $region20
        $region19: #{tpu_custom_call.1} parent=11 // pred_region
          %s195 = ssub.s32 20480, 20480
          %196 = vsyncadd [#allocation7], %s195
          %s197 = sshll.u32 [#allocation8], 4
          %s198 = int_to_ptr.vmem [resolvable:$true] %s197
          %203 = dma.hbm_to_vmem [thread:$0]  %s3, 20480, %s198, [#allocation7], 640, 640, 40
        $region20: #{tpu_custom_call.1} parent=11 // pred_fallthru
          _
        // Predicated region
        $region21: #{tpu_custom_call.1} parent=11 // pred_check
          %p204 = pneg %p147
        $region22: #{tpu_custom_call.1} parent=11 // pred_check_branch
          %206 = sbr.rel (%p204) target = $region24
        $region23: #{tpu_custom_call.1} parent=11 // pred_region
          _
        $region24: #{tpu_custom_call.1} parent=11 // pred_fallthru
          _
      $region12: #{tpu_custom_call.1} parent=5 // pred_fallthru
        _
      %p207 = scmp.lt.s32.totalorder %s18, 7
      // Predicated region
      $region25: #{tpu_custom_call.1} parent=5 // pred_check
        %p208 = pneg %p207
      $region26: #{tpu_custom_call.1} parent=5 // pred_check_branch
        %210 = sbr.rel (%p208) target = $region28
      $region27: #{tpu_custom_call.1} parent=5 // pred_region
        // Predicated region
        $region29: #{tpu_custom_call.1} parent=27 // pred_check
          %p211 = pneg %p52
        $region30: #{tpu_custom_call.1} parent=27 // pred_check_branch
          %213 = sbr.rel (%p211) target = $region32
        $region31: #{tpu_custom_call.1} parent=27 // pred_region
          %s214 = sand.u32 %s42, 1
          %s215 = scalar_lea.sflag [#allocation4], %s214
          %s216 = sand.u32 %s42, 1
          %s217 = smul.addr %s216, 8
          %s218 = scalar_lea.vmem [#allocation3], %s217
          %s220 = ssub.s32 128, 128
          %221 = vsyncadd %s215, %s220
          %s222 = smul.addr %s25, 7
          %s223 = sadd.s32 %s26, %s222
          %s224 = smul.addr %s223, 128
          %s225 = scalar_lea.hbm %s0, %s224
          %s227 = sshll.u32 %s218, 4
          %s228 = int_to_ptr.vmem [resolvable:$true] %s227
          %230 = dma.hbm_to_vmem [thread:$0]  %s225, 128, %s228, %s215
        $region32: #{tpu_custom_call.1} parent=27 // pred_fallthru
          _
        // Predicated region
        $region33: #{tpu_custom_call.1} parent=27 // pred_check
          %p231 = pneg %p78
        $region34: #{tpu_custom_call.1} parent=27 // pred_check_branch
          %233 = sbr.rel (%p231) target = $region36
        $region35: #{tpu_custom_call.1} parent=27 // pred_region
          %s234 = sand.u32 %s18, 1
          %s235 = scalar_lea.sflag [#allocation7], %s234
          %s236 = sand.u32 %s68, 1
          %s237 = smul.addr %s236, 256
          %s238 = scalar_lea.vmem [#allocation6], %s237
          %s239 = smul.u32 16, %s26
          %s241 = ssub.s32 4096, 4096
          %242 = vsyncadd %s235, %s241
          %s243 = smul.addr %s239, 2
          %s244 = smul.addr %s243, 128
          %s245 = scalar_lea.hbm %s1, %s244
          %s246 = sshll.u32 %s238, 4
          %s247 = int_to_ptr.vmem [resolvable:$true] %s246
          %252 = dma.hbm_to_vmem [thread:$0]  %s245, 4096, %s247, %s235, 256, 256, 16
        $region36: #{tpu_custom_call.1} parent=27 // pred_fallthru
          _
      $region28: #{tpu_custom_call.1} parent=5 // pred_fallthru
        _
      %p253 = scmp.le.s32.totalorder 1, %s18
      %p254 = scmp.lt.s32.totalorder %s18, 8
      %p255 = pnand %p253, %p254
      %p256 = pneg %p255
      // Predicated region
      $region37: #{tpu_custom_call.1} parent=5 // pred_check
        _
      $region38: #{tpu_custom_call.1} parent=5 // pred_check_branch
        %258 = sbr.rel (%p255) target = $region40
      $region39: #{tpu_custom_call.1} parent=5 // pred_region
        %s259 = ssub.s32 %s18, 1
        %s260 = sand.u32 %s45, 1
        %s261 = scalar_lea.sflag [#allocation4], %s260
        %s262 = sand.u32 %s45, 1
        %s263 = smul.addr %s262, 8
        %s264 = scalar_lea.vmem [#allocation3], %s263
        // Predicated region
        $region41: #{tpu_custom_call.1} parent=39 // pred_check
          %p265 = pneg %p58
        $region42: #{tpu_custom_call.1} parent=39 // pred_check_branch
          %267 = sbr.rel (%p265) target = $region44
        $region43: #{tpu_custom_call.1} parent=39 // pred_region
          %268 = dma.done %s261, 128
        $region44: #{tpu_custom_call.1} parent=39 // pred_fallthru
          _
        %s269 = sand.u32 %s23, 1
        %s270 = scalar_lea.sflag [#allocation7], %s269
        %s271 = sand.u32 %s71, 1
        %s272 = smul.addr %s271, 256
        %s273 = scalar_lea.vmem [#allocation6], %s272
        // Predicated region
        $region45: #{tpu_custom_call.1} parent=39 // pred_check
          %p274 = pneg %p84
        $region46: #{tpu_custom_call.1} parent=39 // pred_check_branch
          %276 = sbr.rel (%p274) target = $region48
        $region47: #{tpu_custom_call.1} parent=39 // pred_region
          %277 = dma.done %s270, 4096
        $region48: #{tpu_custom_call.1} parent=39 // pred_fallthru
          _
        // Predicated region
        $region49: #{tpu_custom_call.1} parent=39 // pred_check
          %p278 = pneg %p126
        $region50: #{tpu_custom_call.1} parent=39 // pred_check_branch
          %280 = sbr.rel (%p278) target = $region52
        $region51: #{tpu_custom_call.1} parent=39 // pred_region
          %281 = dma.done [#allocation7], 20480
        $region52: #{tpu_custom_call.1} parent=39 // pred_fallthru
          _
        %s282 = sand.u32 %s45, 1
        %s283 = scalar_lea.sflag [#allocation4], %s282
        %s284 = sand.u32 %s45, 1
        %s285 = smul.addr %s284, 8
        %s286 = scalar_lea.vmem [#allocation3], %s285
        %p287 = pneg %p58
        %p288 = pneg %p55
        %s289 = sand.u32 %s23, 1
        %s290 = scalar_lea.sflag [#allocation7], %s289
        %s291 = sand.u32 %s71, 1
        %s292 = smul.addr %s291, 256
        %s293 = scalar_lea.vmem [#allocation6], %s292
        %p294 = pneg %p84
        %p295 = pneg %p81
        %p296 = pneg %p105
        %p297 = pneg %p102
        %p298 = pneg %p126
        %p299 = pneg %p123
        %p300 = pneg %p147
        %p301 = pneg %p144
        %p302 = pneg %p173
        %p303 = pneg %p170
        %s304 = smul.u32 16, %s28
        %p305 = scmp.eq.s32.totalorder %s28, 0
        // Predicated region
        $region53: #{tpu_custom_call.1} parent=39 // pred_check
          %p306 = pneg %p305
        $region54: #{tpu_custom_call.1} parent=39 // pred_check_branch
          %308 = sbr.rel (%p306) target = $region56
        $region55: #{tpu_custom_call.1} parent=39 // pred_region
          %309 = vst [vmem:[#allocation2] sm:$0xff] 0.0
          %310 = vst [vmem:[#allocation2 + $0x8] sm:$0xff] 0.0
        $region56: #{tpu_custom_call.1} parent=39 // pred_fallthru
          _
        %v311 = vld [vmem:[#allocation2] sm:$0xff]
        %v312 = vld [vmem:[#allocation2 + $0x8] sm:$0xff]
        %v313 = vld [vmem:[%s264] sm:$0xff]
        %v314 = vld [vmem:[%s273] sm:$0xff]
        %v315 = vld [vmem:[%s273 + $0x8] sm:$0xff]
        %v316 = vld [vmem:[%s273 + $0x10] sm:$0xff]
        %v317 = vld [vmem:[%s273 + $0x18] sm:$0xff]
        %v318 = vld [vmem:[%s273 + $0x20] sm:$0xff]
        %v319 = vld [vmem:[%s273 + $0x28] sm:$0xff]
        %v320 = vld [vmem:[%s273 + $0x30] sm:$0xff]
        %v321 = vld [vmem:[%s273 + $0x38] sm:$0xff]
        %v322 = vld [vmem:[%s273 + $0x40] sm:$0xff]
        %v323 = vld [vmem:[%s273 + $0x48] sm:$0xff]
        %v324 = vld [vmem:[%s273 + $0x50] sm:$0xff]
        %v325 = vld [vmem:[%s273 + $0x58] sm:$0xff]
        %v326 = vld [vmem:[%s273 + $0x60] sm:$0xff]
        %v327 = vld [vmem:[%s273 + $0x68] sm:$0xff]
        %v328 = vld [vmem:[%s273 + $0x70] sm:$0xff]
        %v329 = vld [vmem:[%s273 + $0x78] sm:$0xff]
        %v330 = vld [vmem:[%s273 + $0x80] sm:$0xff]
        %v331 = vld [vmem:[%s273 + $0x88] sm:$0xff]
        %v332 = vld [vmem:[%s273 + $0x90] sm:$0xff]
        %v333 = vld [vmem:[%s273 + $0x98] sm:$0xff]
        %v334 = vld [vmem:[%s273 + $0xa0] sm:$0xff]
        %v335 = vld [vmem:[%s273 + $0xa8] sm:$0xff]
        %v336 = vld [vmem:[%s273 + $0xb0] sm:$0xff]
        %v337 = vld [vmem:[%s273 + $0xb8] sm:$0xff]
        %v338 = vld [vmem:[%s273 + $0xc0] sm:$0xff]
        %v339 = vld [vmem:[%s273 + $0xc8] sm:$0xff]
        %v340 = vld [vmem:[%s273 + $0xd0] sm:$0xff]
        %v341 = vld [vmem:[%s273 + $0xd8] sm:$0xff]
        %v342 = vld [vmem:[%s273 + $0xe0] sm:$0xff]
        %v343 = vld [vmem:[%s273 + $0xe8] sm:$0xff]
        %v344 = vld [vmem:[%s273 + $0xf0] sm:$0xff]
        %v345 = vld [vmem:[%s273 + $0xf8] sm:$0xff]
        %346 = vmatprep.subr.mxu0 %v345
        %347 = vmatpush1.msra.mxu0 %v344
        %348 = vmatprep.subr.mxu0 %v343
        %349 = vmatpush1.msra.mxu0 %v342
        %350 = vmatprep.subr.mxu0 %v341
        %351 = vmatpush1.msra.mxu0 %v340
        %352 = vmatprep.subr.mxu0 %v339
        %353 = vmatpush1.msra.mxu0 %v338
        %354 = vmatprep.subr.mxu0 %v337
        %355 = vmatpush1.msra.mxu0 %v336
        %356 = vmatprep.subr.mxu0 %v335
        %357 = vmatpush1.msra.mxu0 %v334
        %358 = vmatprep.subr.mxu0 %v333
        %359 = vmatpush1.msra.mxu0 %v332
        %360 = vmatprep.subr.mxu0 %v331
        %361 = vmatpush1.msra.mxu0 %v330
        %362 = vmatprep.subr.mxu0 %v329
        %363 = vmatpush1.msra.mxu0 %v328
        %364 = vmatprep.subr.mxu0 %v327
        %365 = vmatpush1.msra.mxu0 %v326
        %366 = vmatprep.subr.mxu0 %v325
        %367 = vmatpush1.msra.mxu0 %v324
        %368 = vmatprep.subr.mxu0 %v323
        %369 = vmatpush1.msra.mxu0 %v322
        %370 = vmatprep.subr.mxu0 %v321
        %371 = vmatpush1.msra.mxu0 %v320
        %372 = vmatprep.subr.mxu0 %v319
        %373 = vmatpush1.msra.mxu0 %v318
        %374 = vmatprep.subr.mxu0 %v317
        %375 = vmatpush1.msra.mxu0 %v316
        %376 = vmatprep.subr.mxu0 %v315
        %377 = vmatpush1.msra.mxu0 %v314
        %378 = vmatprep.subr.mxu0 0.0
        %379 = vmatpush2.msra.mxu0 0.0
        %380 = vmatprep.subr.mxu0 0.0
        %381 = vmatpush2.msra.mxu0 0.0
        %382 = vmatprep.subr.mxu0 0.0
        %383 = vmatpush2.msra.mxu0 0.0
        %384 = vmatprep.subr.mxu0 0.0
        %385 = vmatpush2.msra.mxu0 0.0
        %386 = vmatprep.subr.mxu0 0.0
        %387 = vmatpush2.msra.mxu0 0.0
        %388 = vmatprep.subr.mxu0 0.0
        %389 = vmatpush2.msra.mxu0 0.0
        %390 = vmatprep.subr.mxu0 0.0
        %391 = vmatpush2.msra.mxu0 0.0
        %392 = vmatprep.subr.mxu0 0.0
        %393 = vmatpush2.msra.mxu0 0.0
        %394 = vmatprep.subr.mxu0 0.0
        %395 = vmatpush2.msra.mxu0 0.0
        %396 = vmatprep.subr.mxu0 0.0
        %397 = vmatpush2.msra.mxu0 0.0
        %398 = vmatprep.subr.mxu0 0.0
        %399 = vmatpush2.msra.mxu0 0.0
        %400 = vmatprep.subr.mxu0 0.0
        %401 = vmatpush2.msra.mxu0 0.0
        %402 = vmatprep.subr.mxu0 0.0
        %403 = vmatpush2.msra.mxu0 0.0
        %404 = vmatprep.subr.mxu0 0.0
        %405 = vmatpush2.msra.mxu0 0.0
        %406 = vmatprep.subr.mxu0 0.0
        %407 = vmatpush2.msra.mxu0 0.0
        %408 = vmatprep.subr.mxu0 0.0
        %409 = vmatpush2.msra.mxu0 0.0
        %410 = vmatprep.mubr.f32.mxu0 0.0
        %411 = vmatmul.mubr.f32.gmra.mxu0 %v313
        %v412 = vpop.f32.mrf.mxu0
        %v413 = vadd.f32 0.0, %v412
        %v414 = vpop.f32.mrf.mxu0
        %v415 = vadd.f32 0.0, %v414
        %416 = vdwg.mxu0
        %v417 = vadd.f32 %v311, %v413
        %v418 = vadd.f32 %v312, %v415
        %419 = vst [vmem:[#allocation2] sm:$0xff] %v417
        %420 = vst [vmem:[#allocation2 + $0x8] sm:$0xff] %v418
        %p421 = scmp.eq.s32.totalorder %s28, 6
        // Predicated region
        $region57: #{tpu_custom_call.1} parent=39 // pred_check
          %p422 = pneg %p421
        $region58: #{tpu_custom_call.1} parent=39 // pred_check_branch
          %424 = sbr.rel (%p422) target = $region60
        $region59: #{tpu_custom_call.1} parent=39 // pred_region
          %v425 = vld [vmem:[#allocation2] sm:$0xff]
          %v426 = vld [vmem:[#allocation2 + $0x8] sm:$0xff]
          %v427 = vld [vmem:[%s2] sm:$0x3]
          %v429 = vlaneseq
          %v430 = vshrl.u32 %v429, 7
          %v431 = vsub.s32 0, %v430
          %v432 = vrot.slane %v427, %v431
          %v433 = vlaneseq
          %v434 = vshrl.u32 %v433, 7
          %v435 = vsub.s32 1, %v434
          %v436 = vrot.slane %v427, %v435
          %v439 = vadd.f32 %v425, %v432
          %v440 = vadd.f32 %v426, %v436
          %vm441 = vcmp.gt.f32.partialorder %v439, 0.0
          %vm442 = vcmp.gt.f32.partialorder %v440, 0.0
          %v443 = vmul.f32 %v439, 0.1
          %v444 = vmul.f32 %v440, 0.1
          %v445 = vsel %vm441, %v439, %v443
          %v446 = vsel %vm442, %v440, %v444
          %v447 = vld [vmem:[#allocation8] sm:$0xff]
          %v448 = vld [vmem:[#allocation8 + $0x8] sm:$0xff]
          %v449 = vld [vmem:[#allocation8 + $0x10] sm:$0xff]
          %v450 = vld [vmem:[#allocation8 + $0x18] sm:$0xff]
          %v451 = vld [vmem:[#allocation8 + $0x20] sm:$0xff]
          %v452 = vld [vmem:[#allocation8 + $0x28] sm:$0xff]
          %v453 = vld [vmem:[#allocation8 + $0x30] sm:$0xff]
          %v454 = vld [vmem:[#allocation8 + $0x38] sm:$0xff]
          %v455 = vld [vmem:[#allocation8 + $0x40] sm:$0xff]
          %v456 = vld [vmem:[#allocation8 + $0x48] sm:$0xff]
          %v457 = vld [vmem:[#allocation8 + $0x50] sm:$0xff]
          %v458 = vld [vmem:[#allocation8 + $0x58] sm:$0xff]
          %v459 = vld [vmem:[#allocation8 + $0x60] sm:$0xff]
          %v460 = vld [vmem:[#allocation8 + $0x68] sm:$0xff]
          %v461 = vld [vmem:[#allocation8 + $0x70] sm:$0xff]
          %v462 = vld [vmem:[#allocation8 + $0x78] sm:$0xff]
          %v463 = vld [vmem:[#allocation8 + $0x80] sm:$0xff]
          %v464 = vld [vmem:[#allocation8 + $0x88] sm:$0xff]
          %v465 = vld [vmem:[#allocation8 + $0x90] sm:$0xff]
          %v466 = vld [vmem:[#allocation8 + $0x98] sm:$0xff]
          %v467 = vld [vmem:[#allocation8 + $0xa0] sm:$0xff]
          %v468 = vld [vmem:[#allocation8 + $0xa8] sm:$0xff]
          %v469 = vld [vmem:[#allocation8 + $0xb0] sm:$0xff]
          %v470 = vld [vmem:[#allocation8 + $0xb8] sm:$0xff]
          %v471 = vld [vmem:[#allocation8 + $0xc0] sm:$0xff]
          %v472 = vld [vmem:[#allocation8 + $0xc8] sm:$0xff]
          %v473 = vld [vmem:[#allocation8 + $0xd0] sm:$0xff]
          %v474 = vld [vmem:[#allocation8 + $0xd8] sm:$0xff]
          %v475 = vld [vmem:[#allocation8 + $0xe0] sm:$0xff]
          %v476 = vld [vmem:[#allocation8 + $0xe8] sm:$0xff]
          %v477 = vld [vmem:[#allocation8 + $0xf0] sm:$0xff]
          %v478 = vld [vmem:[#allocation8 + $0xf8] sm:$0xff]
          %v479 = vld [vmem:[#allocation8 + $0x100] sm:$0xff]
          %v480 = vld [vmem:[#allocation8 + $0x108] sm:$0xff]
          %v481 = vld [vmem:[#allocation8 + $0x110] sm:$0xff]
          %v482 = vld [vmem:[#allocation8 + $0x118] sm:$0xff]
          %v483 = vld [vmem:[#allocation8 + $0x120] sm:$0xff]
          %v484 = vld [vmem:[#allocation8 + $0x128] sm:$0xff]
          %v485 = vld [vmem:[#allocation8 + $0x130] sm:$0xff]
          %v486 = vld [vmem:[#allocation8 + $0x138] sm:$0xff]
          %v487 = vld [vmem:[#allocation8 + $0x140] sm:$0xff]
          %v488 = vld [vmem:[#allocation8 + $0x148] sm:$0xff]
          %v489 = vld [vmem:[#allocation8 + $0x150] sm:$0xff]
          %v490 = vld [vmem:[#allocation8 + $0x158] sm:$0xff]
          %v491 = vld [vmem:[#allocation8 + $0x160] sm:$0xff]
          %v492 = vld [vmem:[#allocation8 + $0x168] sm:$0xff]
          %v493 = vld [vmem:[#allocation8 + $0x170] sm:$0xff]
          %v494 = vld [vmem:[#allocation8 + $0x178] sm:$0xff]
          %v495 = vld [vmem:[#allocation8 + $0x180] sm:$0xff]
          %v496 = vld [vmem:[#allocation8 + $0x188] sm:$0xff]
          %v497 = vld [vmem:[#allocation8 + $0x190] sm:$0xff]
          %v498 = vld [vmem:[#allocation8 + $0x198] sm:$0xff]
          %v499 = vld [vmem:[#allocation8 + $0x1a0] sm:$0xff]
          %v500 = vld [vmem:[#allocation8 + $0x1a8] sm:$0xff]
          %v501 = vld [vmem:[#allocation8 + $0x1b0] sm:$0xff]
          %v502 = vld [vmem:[#allocation8 + $0x1b8] sm:$0xff]
          %v503 = vld [vmem:[#allocation8 + $0x1c0] sm:$0xff]
          %v504 = vld [vmem:[#allocation8 + $0x1c8] sm:$0xff]
          %v505 = vld [vmem:[#allocation8 + $0x1d0] sm:$0xff]
          %v506 = vld [vmem:[#allocation8 + $0x1d8] sm:$0xff]
          %v507 = vld [vmem:[#allocation8 + $0x1e0] sm:$0xff]
          %v508 = vld [vmem:[#allocation8 + $0x1e8] sm:$0xff]
          %v509 = vld [vmem:[#allocation8 + $0x1f0] sm:$0xff]
          %v510 = vld [vmem:[#allocation8 + $0x1f8] sm:$0xff]
          %v511 = vld [vmem:[#allocation8 + $0x200] sm:$0xff]
          %v512 = vld [vmem:[#allocation8 + $0x208] sm:$0xff]
          %v513 = vld [vmem:[#allocation8 + $0x210] sm:$0xff]
          %v514 = vld [vmem:[#allocation8 + $0x218] sm:$0xff]
          %v515 = vld [vmem:[#allocation8 + $0x220] sm:$0xff]
          %v516 = vld [vmem:[#allocation8 + $0x228] sm:$0xff]
          %v517 = vld [vmem:[#allocation8 + $0x230] sm:$0xff]
          %v518 = vld [vmem:[#allocation8 + $0x238] sm:$0xff]
          %v519 = vld [vmem:[#allocation8 + $0x240] sm:$0xff]
          %v520 = vld [vmem:[#allocation8 + $0x248] sm:$0xff]
          %v521 = vld [vmem:[#allocation8 + $0x250] sm:$0xff]
          %v522 = vld [vmem:[#allocation8 + $0x258] sm:$0xff]
          %v523 = vld [vmem:[#allocation8 + $0x260] sm:$0xff]
          %v524 = vld [vmem:[#allocation8 + $0x268] sm:$0xff]
          %v525 = vld [vmem:[#allocation8 + $0x270] sm:$0xff]
          %v526 = vld [vmem:[#allocation8 + $0x278] sm:$0xff]
          %v527 = vld [vmem:[#allocation8 + $0x280] sm:$0xff]
          %v528 = vld [vmem:[#allocation8 + $0x288] sm:$0xff]
          %v529 = vld [vmem:[#allocation8 + $0x290] sm:$0xff]
          %v530 = vld [vmem:[#allocation8 + $0x298] sm:$0xff]
          %v531 = vld [vmem:[#allocation8 + $0x2a0] sm:$0xff]
          %v532 = vld [vmem:[#allocation8 + $0x2a8] sm:$0xff]
          %v533 = vld [vmem:[#allocation8 + $0x2b0] sm:$0xff]
          %v534 = vld [vmem:[#allocation8 + $0x2b8] sm:$0xff]
          %v535 = vld [vmem:[#allocation8 + $0x2c0] sm:$0xff]
          %v536 = vld [vmem:[#allocation8 + $0x2c8] sm:$0xff]
          %v537 = vld [vmem:[#allocation8 + $0x2d0] sm:$0xff]
          %v538 = vld [vmem:[#allocation8 + $0x2d8] sm:$0xff]
          %v539 = vld [vmem:[#allocation8 + $0x2e0] sm:$0xff]
          %v540 = vld [vmem:[#allocation8 + $0x2e8] sm:$0xff]
          %v541 = vld [vmem:[#allocation8 + $0x2f0] sm:$0xff]
          %v542 = vld [vmem:[#allocation8 + $0x2f8] sm:$0xff]
          %v543 = vld [vmem:[#allocation8 + $0x300] sm:$0xff]
          %v544 = vld [vmem:[#allocation8 + $0x308] sm:$0xff]
          %v545 = vld [vmem:[#allocation8 + $0x310] sm:$0xff]
          %v546 = vld [vmem:[#allocation8 + $0x318] sm:$0xff]
          %v547 = vld [vmem:[#allocation8 + $0x320] sm:$0xff]
          %v548 = vld [vmem:[#allocation8 + $0x328] sm:$0xff]
          %v549 = vld [vmem:[#allocation8 + $0x330] sm:$0xff]
          %v550 = vld [vmem:[#allocation8 + $0x338] sm:$0xff]
          %v551 = vld [vmem:[#allocation8 + $0x340] sm:$0xff]
          %v552 = vld [vmem:[#allocation8 + $0x348] sm:$0xff]
          %v553 = vld [vmem:[#allocation8 + $0x350] sm:$0xff]
          %v554 = vld [vmem:[#allocation8 + $0x358] sm:$0xff]
          %v555 = vld [vmem:[#allocation8 + $0x360] sm:$0xff]
          %v556 = vld [vmem:[#allocation8 + $0x368] sm:$0xff]
          %v557 = vld [vmem:[#allocation8 + $0x370] sm:$0xff]
          %v558 = vld [vmem:[#allocation8 + $0x378] sm:$0xff]
          %v559 = vld [vmem:[#allocation8 + $0x380] sm:$0xff]
          %v560 = vld [vmem:[#allocation8 + $0x388] sm:$0xff]
          %v561 = vld [vmem:[#allocation8 + $0x390] sm:$0xff]
          %v562 = vld [vmem:[#allocation8 + $0x398] sm:$0xff]
          %v563 = vld [vmem:[#allocation8 + $0x3a0] sm:$0xff]
          %v564 = vld [vmem:[#allocation8 + $0x3a8] sm:$0xff]
          %v565 = vld [vmem:[#allocation8 + $0x3b0] sm:$0xff]
          %v566 = vld [vmem:[#allocation8 + $0x3b8] sm:$0xff]
          %v567 = vld [vmem:[#allocation8 + $0x3c0] sm:$0xff]
          %v568 = vld [vmem:[#allocation8 + $0x3c8] sm:$0xff]
          %v569 = vld [vmem:[#allocation8 + $0x3d0] sm:$0xff]
          %v570 = vld [vmem:[#allocation8 + $0x3d8] sm:$0xff]
          %v571 = vld [vmem:[#allocation8 + $0x3e0] sm:$0xff]
          %v572 = vld [vmem:[#allocation8 + $0x3e8] sm:$0xff]
          %v573 = vld [vmem:[#allocation8 + $0x3f0] sm:$0xff]
          %v574 = vld [vmem:[#allocation8 + $0x3f8] sm:$0xff]
          %v575 = vld [vmem:[#allocation8 + $0x400] sm:$0xff]
          %v576 = vld [vmem:[#allocation8 + $0x408] sm:$0xff]
          %v577 = vld [vmem:[#allocation8 + $0x410] sm:$0xff]
          %v578 = vld [vmem:[#allocation8 + $0x418] sm:$0xff]
          %v579 = vld [vmem:[#allocation8 + $0x420] sm:$0xff]
          %v580 = vld [vmem:[#allocation8 + $0x428] sm:$0xff]
          %v581 = vld [vmem:[#allocation8 + $0x430] sm:$0xff]
          %v582 = vld [vmem:[#allocation8 + $0x438] sm:$0xff]
          %v583 = vld [vmem:[#allocation8 + $0x440] sm:$0xff]
          %v584 = vld [vmem:[#allocation8 + $0x448] sm:$0xff]
          %v585 = vld [vmem:[#allocation8 + $0x450] sm:$0xff]
          %v586 = vld [vmem:[#allocation8 + $0x458] sm:$0xff]
          %v587 = vld [vmem:[#allocation8 + $0x460] sm:$0xff]
          %v588 = vld [vmem:[#allocation8 + $0x468] sm:$0xff]
          %v589 = vld [vmem:[#allocation8 + $0x470] sm:$0xff]
          %v590 = vld [vmem:[#allocation8 + $0x478] sm:$0xff]
          %v591 = vld [vmem:[#allocation8 + $0x480] sm:$0xff]
          %v592 = vld [vmem:[#allocation8 + $0x488] sm:$0xff]
          %v593 = vld [vmem:[#allocation8 + $0x490] sm:$0xff]
          %v594 = vld [vmem:[#allocation8 + $0x498] sm:$0xff]
          %v595 = vld [vmem:[#allocation8 + $0x4a0] sm:$0xff]
          %v596 = vld [vmem:[#allocation8 + $0x4a8] sm:$0xff]
          %v597 = vld [vmem:[#allocation8 + $0x4b0] sm:$0xff]
          %v598 = vld [vmem:[#allocation8 + $0x4b8] sm:$0xff]
          %v599 = vld [vmem:[#allocation8 + $0x4c0] sm:$0xff]
          %v600 = vld [vmem:[#allocation8 + $0x4c8] sm:$0xff]
          %v601 = vld [vmem:[#allocation8 + $0x4d0] sm:$0xff]
          %v602 = vld [vmem:[#allocation8 + $0x4d8] sm:$0xff]
          %v603 = vld [vmem:[#allocation8 + $0x4e0] sm:$0xff]
          %v604 = vld [vmem:[#allocation8 + $0x4e8] sm:$0xff]
          %v605 = vld [vmem:[#allocation8 + $0x4f0] sm:$0xff]
          %v606 = vld [vmem:[#allocation8 + $0x4f8] sm:$0xff]
          %v607 = vld [vmem:[%s4] sm:$0x1f]
          %v609 = vlaneseq
          %v610 = vshrl.u32 %v609, 7
          %v611 = vsub.s32 0, %v610
          %v612 = vrot.slane %v607, %v611
          %v613 = vlaneseq
          %v614 = vshrl.u32 %v613, 7
          %v615 = vsub.s32 1, %v614
          %v616 = vrot.slane %v607, %v615
          %v617 = vlaneseq
          %v618 = vshrl.u32 %v617, 7
          %v619 = vsub.s32 2, %v618
          %v620 = vrot.slane %v607, %v619
          %v621 = vlaneseq
          %v622 = vshrl.u32 %v621, 7
          %v623 = vsub.s32 3, %v622
          %v624 = vrot.slane %v607, %v623
          %v625 = vlaneseq
          %v626 = vshrl.u32 %v625, 7
          %v627 = vsub.s32 4, %v626
          %v628 = vrot.slane %v607, %v627
          %634 = vmatprep.subr.mxu0 %v523
          %635 = vmatpush1.msra.mxu0 %v522
          %636 = vmatprep.subr.mxu0 %v518
          %637 = vmatpush1.msra.mxu0 %v517
          %638 = vmatprep.subr.mxu0 %v513
          %639 = vmatpush1.msra.mxu0 %v512
          %640 = vmatprep.subr.mxu0 %v508
          %641 = vmatpush1.msra.mxu0 %v507
          %642 = vmatprep.subr.mxu0 %v503
          %643 = vmatpush1.msra.mxu0 %v502
          %644 = vmatprep.subr.mxu0 %v498
          %645 = vmatpush1.msra.mxu0 %v497
          %646 = vmatprep.subr.mxu0 %v493
          %647 = vmatpush1.msra.mxu0 %v492
          %648 = vmatprep.subr.mxu0 %v488
          %649 = vmatpush1.msra.mxu0 %v487
          %650 = vmatprep.subr.mxu0 %v483
          %651 = vmatpush1.msra.mxu0 %v482
          %652 = vmatprep.subr.mxu0 %v478
          %653 = vmatpush1.msra.mxu0 %v477
          %654 = vmatprep.subr.mxu0 %v473
          %655 = vmatpush1.msra.mxu0 %v472
          %656 = vmatprep.subr.mxu0 %v468
          %657 = vmatpush1.msra.mxu0 %v467
          %658 = vmatprep.subr.mxu0 %v463
          %659 = vmatpush1.msra.mxu0 %v462
          %660 = vmatprep.subr.mxu0 %v458
          %661 = vmatpush1.msra.mxu0 %v457
          %662 = vmatprep.subr.mxu0 %v453
          %663 = vmatpush1.msra.mxu0 %v452
          %664 = vmatprep.subr.mxu0 %v448
          %665 = vmatpush1.msra.mxu0 %v447
          %666 = vmatprep.subr.mxu0 %v603
          %667 = vmatpush2.msra.mxu0 %v602
          %668 = vmatprep.subr.mxu0 %v598
          %669 = vmatpush2.msra.mxu0 %v597
          %670 = vmatprep.subr.mxu0 %v593
          %671 = vmatpush2.msra.mxu0 %v592
          %672 = vmatprep.subr.mxu0 %v588
          %673 = vmatpush2.msra.mxu0 %v587
          %674 = vmatprep.subr.mxu0 %v583
          %675 = vmatpush2.msra.mxu0 %v582
          %676 = vmatprep.subr.mxu0 %v578
          %677 = vmatpush2.msra.mxu0 %v577
          %678 = vmatprep.subr.mxu0 %v573
          %679 = vmatpush2.msra.mxu0 %v572
          %680 = vmatprep.subr.mxu0 %v568
          %681 = vmatpush2.msra.mxu0 %v567
          %682 = vmatprep.subr.mxu0 %v563
          %683 = vmatpush2.msra.mxu0 %v562
          %684 = vmatprep.subr.mxu0 %v558
          %685 = vmatpush2.msra.mxu0 %v557
          %686 = vmatprep.subr.mxu0 %v553
          %687 = vmatpush2.msra.mxu0 %v552
          %688 = vmatprep.subr.mxu0 %v548
          %689 = vmatpush2.msra.mxu0 %v547
          %690 = vmatprep.subr.mxu0 %v543
          %691 = vmatpush2.msra.mxu0 %v542
          %692 = vmatprep.subr.mxu0 %v538
          %693 = vmatpush2.msra.mxu0 %v537
          %694 = vmatprep.subr.mxu0 %v533
          %695 = vmatpush2.msra.mxu0 %v532
          %696 = vmatprep.subr.mxu0 %v528
          %697 = vmatpush2.msra.mxu0 %v527
          %698 = vmatprep.mubr.f32.mxu0 %v446
          %699 = vmatmul.mubr.f32.gmra.mxu0 %v445
          %v700 = vpop.f32.mrf.mxu0
          %v701 = vadd.f32 %v612, %v700
          %v702 = vpop.f32.mrf.mxu0
          %v703 = vadd.f32 %v616, %v702
          %704 = vdwg.mxu0
          %705 = vmatprep.subr.mxu0 %v525
          %706 = vmatpush1.msra.mxu0 %v524
          %707 = vmatprep.subr.mxu0 %v520
          %708 = vmatpush1.msra.mxu0 %v519
          %709 = vmatprep.subr.mxu0 %v515
          %710 = vmatpush1.msra.mxu0 %v514
          %711 = vmatprep.subr.mxu0 %v510
          %712 = vmatpush1.msra.mxu0 %v509
          %713 = vmatprep.subr.mxu0 %v505
          %714 = vmatpush1.msra.mxu0 %v504
          %715 = vmatprep.subr.mxu0 %v500
          %716 = vmatpush1.msra.mxu0 %v499
          %717 = vmatprep.subr.mxu0 %v495
          %718 = vmatpush1.msra.mxu0 %v494
          %719 = vmatprep.subr.mxu0 %v490
          %720 = vmatpush1.msra.mxu0 %v489
          %721 = vmatprep.subr.mxu0 %v485
          %722 = vmatpush1.msra.mxu0 %v484
          %723 = vmatprep.subr.mxu0 %v480
          %724 = vmatpush1.msra.mxu0 %v479
          %725 = vmatprep.subr.mxu0 %v475
          %726 = vmatpush1.msra.mxu0 %v474
          %727 = vmatprep.subr.mxu0 %v470
          %728 = vmatpush1.msra.mxu0 %v469
          %729 = vmatprep.subr.mxu0 %v465
          %730 = vmatpush1.msra.mxu0 %v464
          %731 = vmatprep.subr.mxu0 %v460
          %732 = vmatpush1.msra.mxu0 %v459
          %733 = vmatprep.subr.mxu0 %v455
          %734 = vmatpush1.msra.mxu0 %v454
          %735 = vmatprep.subr.mxu0 %v450
          %736 = vmatpush1.msra.mxu0 %v449
          %737 = vmatprep.subr.mxu0 %v605
          %738 = vmatpush2.msra.mxu0 %v604
          %739 = vmatprep.subr.mxu0 %v600
          %740 = vmatpush2.msra.mxu0 %v599
          %741 = vmatprep.subr.mxu0 %v595
          %742 = vmatpush2.msra.mxu0 %v594
          %743 = vmatprep.subr.mxu0 %v590
          %744 = vmatpush2.msra.mxu0 %v589
          %745 = vmatprep.subr.mxu0 %v585
          %746 = vmatpush2.msra.mxu0 %v584
          %747 = vmatprep.subr.mxu0 %v580
          %748 = vmatpush2.msra.mxu0 %v579
          %749 = vmatprep.subr.mxu0 %v575
          %750 = vmatpush2.msra.mxu0 %v574
          %751 = vmatprep.subr.mxu0 %v570
          %752 = vmatpush2.msra.mxu0 %v569
          %753 = vmatprep.subr.mxu0 %v565
          %754 = vmatpush2.msra.mxu0 %v564
          %755 = vmatprep.subr.mxu0 %v560
          %756 = vmatpush2.msra.mxu0 %v559
          %757 = vmatprep.subr.mxu0 %v555
          %758 = vmatpush2.msra.mxu0 %v554
          %759 = vmatprep.subr.mxu0 %v550
          %760 = vmatpush2.msra.mxu0 %v549
          %761 = vmatprep.subr.mxu0 %v545
          %762 = vmatpush2.msra.mxu0 %v544
          %763 = vmatprep.subr.mxu0 %v540
          %764 = vmatpush2.msra.mxu0 %v539
          %765 = vmatprep.subr.mxu0 %v535
          %766 = vmatpush2.msra.mxu0 %v534
          %767 = vmatprep.subr.mxu0 %v530
          %768 = vmatpush2.msra.mxu0 %v529
          %769 = vmatprep.mubr.f32.mxu0 %v446
          %770 = vmatmul.mubr.f32.gmra.mxu0 %v445
          %v771 = vpop.f32.mrf.mxu0
          %v772 = vadd.f32 %v620, %v771
          %v773 = vpop.f32.mrf.mxu0
          %v774 = vadd.f32 %v624, %v773
          %775 = vdwg.mxu0
          %776 = vmatprep.subr.mxu0 0.0
          %777 = vmatpush1.msra.mxu0 %v526
          %778 = vmatprep.subr.mxu0 0.0
          %779 = vmatpush1.msra.mxu0 %v521
          %780 = vmatprep.subr.mxu0 0.0
          %781 = vmatpush1.msra.mxu0 %v516
          %782 = vmatprep.subr.mxu0 0.0
          %783 = vmatpush1.msra.mxu0 %v511
          %784 = vmatprep.subr.mxu0 0.0
          %785 = vmatpush1.msra.mxu0 %v506
          %786 = vmatprep.subr.mxu0 0.0
          %787 = vmatpush1.msra.mxu0 %v501
          %788 = vmatprep.subr.mxu0 0.0
          %789 = vmatpush1.msra.mxu0 %v496
          %790 = vmatprep.subr.mxu0 0.0
          %791 = vmatpush1.msra.mxu0 %v491
          %792 = vmatprep.subr.mxu0 0.0
          %793 = vmatpush1.msra.mxu0 %v486
          %794 = vmatprep.subr.mxu0 0.0
          %795 = vmatpush1.msra.mxu0 %v481
          %796 = vmatprep.subr.mxu0 0.0
          %797 = vmatpush1.msra.mxu0 %v476
          %798 = vmatprep.subr.mxu0 0.0
          %799 = vmatpush1.msra.mxu0 %v471
          %800 = vmatprep.subr.mxu0 0.0
          %801 = vmatpush1.msra.mxu0 %v466
          %802 = vmatprep.subr.mxu0 0.0
          %803 = vmatpush1.msra.mxu0 %v461
          %804 = vmatprep.subr.mxu0 0.0
          %805 = vmatpush1.msra.mxu0 %v456
          %806 = vmatprep.subr.mxu0 0.0
          %807 = vmatpush1.msra.mxu0 %v451
          %808 = vmatprep.subr.mxu0 0.0
          %809 = vmatpush2.msra.mxu0 %v606
          %810 = vmatprep.subr.mxu0 0.0
          %811 = vmatpush2.msra.mxu0 %v601
          %812 = vmatprep.subr.mxu0 0.0
          %813 = vmatpush2.msra.mxu0 %v596
          %814 = vmatprep.subr.mxu0 0.0
          %815 = vmatpush2.msra.mxu0 %v591
          %816 = vmatprep.subr.mxu0 0.0
          %817 = vmatpush2.msra.mxu0 %v586
          %818 = vmatprep.subr.mxu0 0.0
          %819 = vmatpush2.msra.mxu0 %v581
          %820 = vmatprep.subr.mxu0 0.0
          %821 = vmatpush2.msra.mxu0 %v576
          %822 = vmatprep.subr.mxu0 0.0
          %823 = vmatpush2.msra.mxu0 %v571
          %824 = vmatprep.subr.mxu0 0.0
          %825 = vmatpush2.msra.mxu0 %v566
          %826 = vmatprep.subr.mxu0 0.0
          %827 = vmatpush2.msra.mxu0 %v561
          %828 = vmatprep.subr.mxu0 0.0
          %829 = vmatpush2.msra.mxu0 %v556
          %830 = vmatprep.subr.mxu0 0.0
          %831 = vmatpush2.msra.mxu0 %v551
          %832 = vmatprep.subr.mxu0 0.0
          %833 = vmatpush2.msra.mxu0 %v546
          %834 = vmatprep.subr.mxu0 0.0
          %835 = vmatpush2.msra.mxu0 %v541
          %836 = vmatprep.subr.mxu0 0.0
          %837 = vmatpush2.msra.mxu0 %v536
          %838 = vmatprep.subr.mxu0 0.0
          %839 = vmatpush2.msra.mxu0 %v531
          %840 = vmatprep.mubr.f32.mxu0 %v446
          %841 = vmatmul.mubr.f32.gmra.mxu0 %v445
          %v842 = vpop.f32.mrf.mxu0
          %v843 = vadd.f32 %v628, %v842
          %v844 = vpop.f32.mrf.mxu0
          %845 = vdwg.mxu0
          %846 = vst [vmem:[#allocation9] sm:$0xff] %v701
          %847 = vst [vmem:[#allocation9 + $0x8] sm:$0xff] %v703
          %848 = vst [vmem:[#allocation9 + $0x10] sm:$0xff] %v772
          %849 = vst [vmem:[#allocation9 + $0x18] sm:$0xff] %v774
          %850 = vst [vmem:[#allocation9 + $0x20] sm:$0xff] %v843
        $region60: #{tpu_custom_call.1} parent=39 // pred_fallthru
          _
        // Predicated region
        $region61: #{tpu_custom_call.1} parent=39 // pred_check
          %p851 = pneg %p170
        $region62: #{tpu_custom_call.1} parent=39 // pred_check_branch
          %853 = sbr.rel (%p851) target = $region64
        $region63: #{tpu_custom_call.1} parent=39 // pred_region
          %s855 = ssub.s32 640, 640
          %856 = vsyncadd [#allocation5], %s855
          %s857 = smul.addr %s27, 5
          %s858 = smul.addr %s857, 128
          %s859 = scalar_lea.hbm %s5, %s858
          %s861 = sshll.u32 [#allocation9], 4
          %s862 = int_to_ptr.vmem [resolvable:$true] %s861
          %864 = dma.vmem_to_hbm [thread:$0]  %s862, 640, %s859, [#allocation5]
        $region64: #{tpu_custom_call.1} parent=39 // pred_fallthru
          _
        // Predicated region
        $region65: #{tpu_custom_call.1} parent=39 // pred_check
          %p865 = pneg %p170
        $region66: #{tpu_custom_call.1} parent=39 // pred_check_branch
          %867 = sbr.rel (%p865) target = $region68
        $region67: #{tpu_custom_call.1} parent=39 // pred_region
          %868 = dma.done [#allocation5], 640
        $region68: #{tpu_custom_call.1} parent=39 // pred_fallthru
          _
      $region40: #{tpu_custom_call.1} parent=5 // pred_fallthru
        _
      %p869 = scmp.le.s32.totalorder 2, %s18
      // Predicated region
      $region69: #{tpu_custom_call.1} parent=5 // pred_check
        %p870 = pneg %p869
      $region70: #{tpu_custom_call.1} parent=5 // pred_check_branch
        %872 = sbr.rel (%p870) target = $region72
      $region71: #{tpu_custom_call.1} parent=5 // pred_region
        %s873 = ssub.s32 %s18, 2
      $region72: #{tpu_custom_call.1} parent=5 // pred_fallthru
        _
    $region6: #{tpu_custom_call.1} parent=1 // loop_footer
      %s22 = sadd.s32 1, %s18
    $region7: #{tpu_custom_call.1} parent=1 // loop_footer_branch
      %17 = sbr.rel target = $region3
    $region8: #{tpu_custom_call.1} parent=1 // loop_exit
      _
    %874 = vsyncpa [#allocation4], 1
    %s875 = scalar_lea.sflag [#allocation4], 1
    %876 = vsyncpa %s875, 1
    %877 = vsyncpa [#allocation7], 1
    %s878 = scalar_lea.sflag [#allocation7], 1
    %879 = vsyncpa %s878, 1
    %880 = vsyncpa [#allocation5], 1
    %s881 = scalar_lea.sflag [#allocation5], 1
    %882 = vsyncpa %s881, 1

</llo_original>
